<compile_context>
chip_gen: v7x
topology: tpu7x:2x2x1
jax: 0.10.0
libtpu: 0.0.40
codegen_flags: <defaults>
</compile_context>

<pallas_src>
import functools

import jax
import jax.numpy as jnp
from jax.experimental import pallas as pl
from jax.experimental.pallas import tpu as pltpu


def _sinkhorn_kernel(x_ref, out_ref, *, num_iters, inv_epsilon, stabilize):
    """Whole-array Sinkhorn-Knopp; x_ref / out_ref are full [B, K] VMEM blocks."""
    x = x_ref[...].astype(jnp.float32)                       # [B, K]

    # exp(logits/eps) with the division folded into a multiply.
    scaled = x * inv_epsilon
    if stabilize:
        # Per-prototype max over the batch axis; this per-k factor cancels
        # exactly in the first per-prototype normalization below.
        scaled = scaled - jnp.max(scaled, axis=0, keepdims=True)
    P0 = jnp.exp(scaled)                                      # fixed across iterations

    # Scaling-vector Sinkhorn.  num_iters is tiny (3) -> static unroll.
    #   torch: Q /= sum(Q, dim=1); the /K that follows is uniform and cancels -> c
    #   torch: Q /= sum(Q, dim=0); the /B and the trailing *B cancel          -> a
    # First iteration has a == 1, so skip the wasted full-array multiply.
    c = pl.reciprocal(jnp.sum(P0, axis=0, keepdims=True), approx=False)        # [1, K]
    a = pl.reciprocal(jnp.sum(P0 * c, axis=1, keepdims=True), approx=False)    # [B, 1]
    for _ in range(num_iters - 1):
        c = pl.reciprocal(jnp.sum(P0 * a, axis=0, keepdims=True), approx=False)
        a = pl.reciprocal(jnp.sum(P0 * c, axis=1, keepdims=True), approx=False)

    # Materialize the normalized matrix exactly once.
    out_ref[...] = ((P0 * c) * a).astype(out_ref.dtype)


def _physical_vmem_bytes(default=64 * 1024 * 1024):
    """Per-core VMEM capacity; conservative 64 MiB fallback (v7x) if unknown."""
    try:
        info = pltpu.get_tpu_info()
        cap = getattr(info, "vmem_capacity_bytes", None)
        if cap:
            return int(cap)
    except Exception:
        pass
    return default


def sinkhorn_knopp(logits: jax.Array, num_iters: int = 3,
                   epsilon: float = 0.5, stabilize: bool = True) -> jax.Array:
    """Pallas TPU equivalent of SinkhornKnopp.forward (returns [B, K])."""
    if num_iters < 1:
        raise ValueError("num_iters must be >= 1")
    B, K = logits.shape

    kernel = functools.partial(
        _sinkhorn_kernel,
        num_iters=int(num_iters),
        inv_epsilon=float(1.0 / epsilon),
        stabilize=bool(stabilize),
    )

    # VMEM budget: x block + P0 + epilogue temporaries (all f32), with
    # headroom, clamped to ~87% of the chip's physical VMEM so the limit is
    # legal on v7x (64 MiB) as well as v5e/v6e (128 MiB).
    arr_f32 = int(B) * int(K) * 4
    io_bytes = 2 * int(B) * int(K) * jnp.dtype(logits.dtype).itemsize
    need = max(32 * 1024 * 1024, 4 * arr_f32 + io_bytes)
    vmem_limit = int(min(need, int(_physical_vmem_bytes() * 0.875)))

    out = pl.pallas_call(
        kernel,
        out_shape=jax.ShapeDtypeStruct((B, K), logits.dtype),
        in_specs=[pl.BlockSpec(memory_space=pltpu.MemorySpace.VMEM)],
        out_specs=pl.BlockSpec(memory_space=pltpu.MemorySpace.VMEM),
        compiler_params=pltpu.CompilerParams(vmem_limit_bytes=vmem_limit),
    )(logits)
    return out


def _sinkhorn_ref(logits: jax.Array, num_iters: int = 3,
                  epsilon: float = 0.5) -> jax.Array:
    """Pure-JAX reference mirroring the PyTorch code literally."""
    Q = jnp.exp(logits / epsilon).T
    B = Q.shape[1]
    K = Q.shape[0]
    Q = Q / jnp.sum(Q)
    for _ in range(num_iters):
        Q = Q / jnp.sum(Q, axis=1, keepdims=True)
        Q = Q / K
        Q = Q / jnp.sum(Q, axis=0, keepdims=True)
        Q = Q / B
    Q = Q * B
    return Q.T


if __name__ == "__main__":
    key = jax.random.PRNGKey(0)
    k1, k2 = jax.random.split(key)

    # Small shape consistent with the module: 8 samples, 32 prototypes.
    B, K = 8, 32
    logits = jax.random.normal(k1, (B, K), dtype=jnp.float32)
    ref = jax.block_until_ready(_sinkhorn_ref(logits, num_iters=3, epsilon=0.5))
    out = jax.block_until_ready(sinkhorn_knopp(logits, num_iters=3, epsilon=0.5))
    assert out.shape == (B, K)
    assert jnp.allclose(out, ref, atol=1e-5, rtol=1e-5), \
        "mismatch vs reference (8x32)"

    # Larger batch (full 128-lane sublane tiles) through the same code path.
    B2, K2 = 128, 32
    logits2 = jax.random.normal(k2, (B2, K2), dtype=jnp.float32)
    ref2 = jax.block_until_ready(_sinkhorn_ref(logits2, num_iters=3, epsilon=0.5))
    out2 = jax.block_until_ready(sinkhorn_knopp(logits2, num_iters=3, epsilon=0.5))
    assert out2.shape == (B2, K2)
    assert jnp.allclose(out2, ref2, atol=1e-5, rtol=1e-5), \
        "mismatch vs reference (128x32)"

    print("KERNEL_OK")
</pallas_src>

<mosaic_0001>
module attributes {stable_mosaic.version = 11 : i64} {
  func.func @_sinkhorn_kernel(%arg0: memref<8x32xf32, #tpu.memory_space<vmem>>, %arg1: memref<8x32xf32, #tpu.memory_space<vmem>>) attributes {dimension_semantics = [], scalar_prefetch = 0 : i64, scratch_operands = 0 : i64, tpu.core_type = #tpu.core_type<tc>} {
    %c0 = arith.constant 0 : index
    %c0_0 = arith.constant 0 : index
    %0 = vector.load %arg0[%c0, %c0_0] : memref<8x32xf32, #tpu.memory_space<vmem>>, vector<8x32xf32>
    %cst = arith.constant 2.000000e+00 : f32
    %1 = vector.broadcast %cst : f32 to vector<8x32xf32>
    %2 = arith.mulf %0, %1 : vector<8x32xf32>
    %cst_1 = arith.constant dense<0xFF800000> : vector<32xf32>
    %3 = vector.multi_reduction <maximumf>, %2, %cst_1 [0] : vector<8x32xf32> to vector<32xf32>
    %4 = vector.shape_cast %3 : vector<32xf32> to vector<1x32xf32>
    %5 = vector.broadcast %4 : vector<1x32xf32> to vector<8x32xf32>
    %6 = arith.subf %2, %5 : vector<8x32xf32>
    %7 = math.exp %6 : vector<8x32xf32>
    %cst_2 = arith.constant dense<0.000000e+00> : vector<32xf32>
    %8 = vector.multi_reduction <add>, %7, %cst_2 [0] : vector<8x32xf32> to vector<32xf32>
    %9 = vector.shape_cast %8 : vector<32xf32> to vector<1x32xf32>
    %10 = tpu.reciprocal %9 : vector<1x32xf32> -> vector<1x32xf32>
    %11 = vector.broadcast %10 : vector<1x32xf32> to vector<8x32xf32>
    %12 = arith.mulf %7, %11 : vector<8x32xf32>
    %cst_3 = arith.constant dense<0.000000e+00> : vector<8xf32>
    %13 = vector.multi_reduction <add>, %12, %cst_3 [1] : vector<8x32xf32> to vector<8xf32>
    %14 = vector.shape_cast %13 : vector<8xf32> to vector<8x1xf32>
    %15 = tpu.reciprocal %14 : vector<8x1xf32> -> vector<8x1xf32>
    %16 = vector.broadcast %15 : vector<8x1xf32> to vector<8x32xf32>
    %17 = arith.mulf %7, %16 : vector<8x32xf32>
    %cst_4 = arith.constant dense<0.000000e+00> : vector<32xf32>
    %18 = vector.multi_reduction <add>, %17, %cst_4 [0] : vector<8x32xf32> to vector<32xf32>
    %19 = vector.shape_cast %18 : vector<32xf32> to vector<1x32xf32>
    %20 = tpu.reciprocal %19 : vector<1x32xf32> -> vector<1x32xf32>
    %21 = vector.broadcast %20 : vector<1x32xf32> to vector<8x32xf32>
    %22 = arith.mulf %7, %21 : vector<8x32xf32>
    %cst_5 = arith.constant dense<0.000000e+00> : vector<8xf32>
    %23 = vector.multi_reduction <add>, %22, %cst_5 [1] : vector<8x32xf32> to vector<8xf32>
    %24 = vector.shape_cast %23 : vector<8xf32> to vector<8x1xf32>
    %25 = tpu.reciprocal %24 : vector<8x1xf32> -> vector<8x1xf32>
    %26 = vector.broadcast %25 : vector<8x1xf32> to vector<8x32xf32>
    %27 = arith.mulf %7, %26 : vector<8x32xf32>
    %cst_6 = arith.constant dense<0.000000e+00> : vector<32xf32>
    %28 = vector.multi_reduction <add>, %27, %cst_6 [0] : vector<8x32xf32> to vector<32xf32>
    %29 = vector.shape_cast %28 : vector<32xf32> to vector<1x32xf32>
    %30 = tpu.reciprocal %29 : vector<1x32xf32> -> vector<1x32xf32>
    %31 = vector.broadcast %30 : vector<1x32xf32> to vector<8x32xf32>
    %32 = arith.mulf %7, %31 : vector<8x32xf32>
    %cst_7 = arith.constant dense<0.000000e+00> : vector<8xf32>
    %33 = vector.multi_reduction <add>, %32, %cst_7 [1] : vector<8x32xf32> to vector<8xf32>
    %34 = vector.shape_cast %33 : vector<8xf32> to vector<8x1xf32>
    %35 = tpu.reciprocal %34 : vector<8x1xf32> -> vector<8x1xf32>
    %36 = vector.broadcast %30 : vector<1x32xf32> to vector<8x32xf32>
    %37 = arith.mulf %7, %36 : vector<8x32xf32>
    %38 = vector.broadcast %35 : vector<8x1xf32> to vector<8x32xf32>
    %39 = arith.mulf %37, %38 : vector<8x32xf32>
    %c0_8 = arith.constant 0 : index
    %c0_9 = arith.constant 0 : index
    %40 = vector.load %arg1[%c0_8, %c0_9] : memref<8x32xf32, #tpu.memory_space<vmem>>, vector<8x32xf32>
    tpu.vector_store %arg1[%c0_8, %c0_9], %39 {strides = array<i32>} : memref<8x32xf32, #tpu.memory_space<vmem>>, vector<8x32xf32>,
    return
  }
}

</mosaic_0001>

<llo_original>
// kernel: tpu_custom_call.1
$region0: #{tpu_custom_call.1}
  #allocation0 [shape = 'u32[]', space=smem, size = 0x4, offset = 0x4, fixed_abs, tag = 'smem constant byte address 0x4 - core index']
  #allocation1 [shape = 'u32[144,128]{1,0:T(1,128)}', space=vmem, size = 0x12000, scoped, tag = 'internal scratch']
  %s0 = inlined_call_operand.hbm [shape: f32[8,32], index: 0, kind: input, shape index: {}]
  %s1 = inlined_call_operand.hbm [shape: f32[8,32], index: 1, kind: output, shape index: {}]
  %s2 = sld [smem:[#allocation0]]
  $region18: #{tpu_custom_call.1} parent=0
    _
  %s4 = ssub.s32 1, %s2
  %s5 = scalar_select 0, %s4, %s2
  $region1: #{tpu_custom_call.1} parent=0
    #allocation2 [shape = 'u8[4096]{0}', space=vmem, size = 0x1000, scoped, tag = 'input window, operand 0, single buffered']
    #allocation3 [shape = 's32[1]{0}', space=sflag, size = 0x4, scoped, tag = 'scoped memory for tpu_custom_call.1']
    #allocation4 [shape = 's32[1]{0}', space=sflag, size = 0x4, scoped, tag = 'scoped memory for tpu_custom_call.1']
    #allocation5 [shape = 'u8[4096]{0}', space=vmem, size = 0x1000, scoped, tag = 'output window, operand 0, single buffered']
    %6 = vsyncpa [#allocation3], 0
    %7 = vsyncpa [#allocation4], 0
    // Predicated region
    $region2: #{tpu_custom_call.1} parent=1 // pred_check
      _
    $region3: #{tpu_custom_call.1} parent=1 // pred_check_branch
      %9 = sbr.rel (0) target = $region5
    $region4: #{tpu_custom_call.1} parent=1 // pred_region
      %s11 = ssub.s32 128, 128
      %12 = vsyncadd [#allocation3], %s11
      %s14 = sshll.u32 [#allocation2], 4
      %s15 = int_to_ptr.vmem [resolvable:$true] %s14
      %17 = dma.hbm_to_vmem [thread:$0]  %s0, 128, %s15, [#allocation3]
    $region5: #{tpu_custom_call.1} parent=1 // pred_fallthru
      _
    // Predicated region
    $region6: #{tpu_custom_call.1} parent=1 // pred_check
      _
    $region7: #{tpu_custom_call.1} parent=1 // pred_check_branch
      %19 = sbr.rel (0) target = $region9
    $region8: #{tpu_custom_call.1} parent=1 // pred_region
      %20 = dma.done [#allocation3], 128
    $region9: #{tpu_custom_call.1} parent=1 // pred_fallthru
      _
    %v21 = vld [vmem:[#allocation2] sm:$0xff]
    %v22 = vmul.f32 %v21, 2.0
    %vm23 = vcmask 261120
    %v24 = vsel %vm23, %v22, -inf
    %v25 = vrot.slane %v24, 4
    %v26 = vmax.f32 %v24, %v25
    %v27 = vrot.slane %v26, 2
    %v28 = vmax.f32 %v26, %v27
    %v29 = vrot.slane %v28, 1
    %v30 = vmax.f32 %v28, %v29
    %v31 = vsub.f32 %v22, %v30
    %v32 = vmul.f32 %v31, 1.442695
    %v33 = vpow.pop %v32
    %v34 = vsel %vm23, %v33, 0.0
    %v35 = vrot.slane %v34, 4
    %v36 = vadd.f32 %v34, %v35
    %v37 = vrot.slane %v36, 2
    %v38 = vadd.f32 %v36, %v37
    %v39 = vrot.slane %v38, 1
    %v40 = vadd.f32 %v38, %v39
    %v41 = vrcp.pop %v40
    %v42 = vmul.f32 %v33, %v41
    %v43 = vsel %vm23, %v42, 0.0
    %44 = vadd.xlane.f32.xlu0 %v43
    %v45 = vpop.xlane.xlu0 %44
    %v46 = vrcp.pop %v45
    %v47 = vmul.f32 %v33, %v46
    %v48 = vsel %vm23, %v47, 0.0
    %v49 = vrot.slane %v48, 4
    %v50 = vadd.f32 %v48, %v49
    %v51 = vrot.slane %v50, 2
    %v52 = vadd.f32 %v50, %v51
    %v53 = vrot.slane %v52, 1
    %v54 = vadd.f32 %v52, %v53
    %v55 = vrcp.pop %v54
    %v56 = vmul.f32 %v33, %v55
    %v57 = vsel %vm23, %v56, 0.0
    %58 = vadd.xlane.f32.xlu0 %v57
    %v59 = vpop.xlane.xlu0 %58
    %v60 = vrcp.pop %v59
    %v61 = vmul.f32 %v33, %v60
    %v62 = vsel %vm23, %v61, 0.0
    %v63 = vrot.slane %v62, 4
    %v64 = vadd.f32 %v62, %v63
    %v65 = vrot.slane %v64, 2
    %v66 = vadd.f32 %v64, %v65
    %v67 = vrot.slane %v66, 1
    %v68 = vadd.f32 %v66, %v67
    %v69 = vrcp.pop %v68
    %v70 = vmul.f32 %v33, %v69
    %v71 = vsel %vm23, %v70, 0.0
    %72 = vadd.xlane.f32.xlu0 %v71
    %v73 = vpop.xlane.xlu0 %72
    %v74 = vrcp.pop %v73
    %v75 = vmul.f32 %v70, %v74
    %76 = vst.msk [vmem:[#allocation5] sm:$0xff] %vm23, %v75
    // Predicated region
    $region10: #{tpu_custom_call.1} parent=1 // pred_check
      _
    $region11: #{tpu_custom_call.1} parent=1 // pred_check_branch
      %78 = sbr.rel (0) target = $region13
    $region12: #{tpu_custom_call.1} parent=1 // pred_region
      %s80 = ssub.s32 128, 128
      %81 = vsyncadd [#allocation4], %s80
      %s83 = sshll.u32 [#allocation5], 4
      %s84 = int_to_ptr.vmem [resolvable:$true] %s83
      %86 = dma.vmem_to_hbm [thread:$0]  %s84, 128, %s1, [#allocation4]
    $region13: #{tpu_custom_call.1} parent=1 // pred_fallthru
      _
    // Predicated region
    $region14: #{tpu_custom_call.1} parent=1 // pred_check
      _
    $region15: #{tpu_custom_call.1} parent=1 // pred_check_branch
      %88 = sbr.rel (0) target = $region17
    $region16: #{tpu_custom_call.1} parent=1 // pred_region
      %89 = dma.done [#allocation4], 128
    $region17: #{tpu_custom_call.1} parent=1 // pred_fallthru
      _
    %90 = vsyncpa [#allocation3], 1
    %91 = vsyncpa [#allocation4], 1

</llo_original>
